<compile_context>
chip_gen: v6e
topology: v6e:2x2x1
jax: 0.10.0
libtpu: 0.0.40
codegen_flags: <defaults>
</compile_context>

<pallas_src>
import functools

import jax
import jax.numpy as jnp
from jax.experimental import pallas as pl
from jax.experimental.pallas import tpu as pltpu

_SUBLANE = 8
_LANE = 128
_VMEM_LIMIT = 32 * 1024 * 1024       # scoped VMEM limit (safe on v5e..v7x)
_CHUNK_BUDGET = 8 * 1024 * 1024      # double-buffered gx+y per time chunk


def _round_up(x, m):
    return (x + m - 1) // m * m


# ---------------------------------------------------------------------------
# Kernels
# ---------------------------------------------------------------------------
def _matmul_bias_kernel(x_ref, w_ref, b_ref, o_ref):
    """o = x @ w + b (bf16 operands, f32 accumulate)."""
    o_ref[...] = (jnp.dot(x_ref[...], w_ref[...],
                          preferred_element_type=jnp.float32)
                  + b_ref[...])


def _lstm_recurrence_kernel(gx_ref, whh_ref, h0_ref, c0_ref,
                            y_ref, h_ref, c_ref, *, s_total, ragged):
    """Sequential LSTM recurrence over one time chunk.

    gx_ref : (T*Bp, 4H) f32  precomputed x_t @ W_ih + (b_ih + b_hh), time-major
    whh_ref: (H, 4H)   bf16  hidden->hidden weight (transposed, [i|f|o|g])
    h0/c0  : (Bp, H)   f32   initial state (batch padded to a sublane multiple)
    y_ref  : (T*Bp, H) f32   hidden outputs for this chunk
    h_/c_ref: (Bp, H)  f32   constant-index output blocks = cross-chunk carry
    """
    chunk = pl.program_id(0)

    @pl.when(chunk == 0)
    def _():
        h_ref[...] = h0_ref[...]
        c_ref[...] = c0_ref[...]

    Bp, H = h_ref.shape
    T = gx_ref.shape[0] // Bp
    whh = whh_ref[...]                       # hoisted: loaded once per chunk
    t_base = chunk * T

    def step(t, carry):
        h, c = carry
        row = pl.multiple_of(t * Bp, _SUBLANE)
        gates = gx_ref[pl.ds(row, Bp), :] + jnp.dot(
            h.astype(whh.dtype), whh, preferred_element_type=jnp.float32)
        # Gate layout is [i | f | o | g]: one sigmoid over the first 3H lanes,
        # one tanh over the last H lanes (2 EUP launches instead of 4).
        sig = jax.nn.sigmoid(gates[:, :3 * H])
        g_g = jnp.tanh(gates[:, 3 * H:])
        i_g = sig[:, 0 * H:1 * H]
        f_g = sig[:, 1 * H:2 * H]
        o_g = sig[:, 2 * H:3 * H]
        c_new = f_g * c + i_g * g_g
        h_new = o_g * jnp.tanh(c_new)
        y_ref[pl.ds(row, Bp), :] = h_new
        if ragged:
            # Last chunk may extend past the real sequence: keep prior state
            # for padded timesteps (their y writes are masked by Pallas).
            valid = (t_base + t) < s_total
            h_new = jnp.where(valid, h_new, h)
            c_new = jnp.where(valid, c_new, c)
        return h_new, c_new

    h_fin, c_fin = jax.lax.fori_loop(
        0, T, step, (h_ref[...], c_ref[...]), unroll=min(4, T))

    h_ref[...] = h_fin
    c_ref[...] = c_fin


# ---------------------------------------------------------------------------
# Wrappers
# ---------------------------------------------------------------------------
def matmul_bias(x, w, b, *, tm=256):
    """(M,K)@(K,N) + b with bf16 operands and f32 output, row-tiled over M."""
    M, K = x.shape
    N = w.shape[-1]
    tm = min(tm, M)                         # small M: one (small) full block
    grid = (pl.cdiv(M, tm),)                # ragged tail handled by masking
    return pl.pallas_call(
        _matmul_bias_kernel,
        out_shape=jax.ShapeDtypeStruct((M, N), jnp.float32),
        grid_spec=pltpu.PrefetchScalarGridSpec(
            num_scalar_prefetch=0,
            grid=grid,
            in_specs=[
                pl.BlockSpec((tm, K), lambda i: (i, 0)),
                pl.BlockSpec((K, N), lambda i: (0, 0)),
                pl.BlockSpec((1, N), lambda i: (0, 0)),
            ],
            out_specs=pl.BlockSpec((tm, N), lambda i: (i, 0)),
        ),
        compiler_params=pltpu.CompilerParams(
            dimension_semantics=("parallel",),
            vmem_limit_bytes=_VMEM_LIMIT),
    )(x, w, b)


def lstm_layer(x_flat, seq_len, w_ih_t, w_hh_t, b, h0, c0):
    """One LSTM layer.  x_flat: (S*Bp, n_in) bf16, time-major, batch-padded."""
    S = seq_len
    Bp, H = h0.shape

    # Hoisted input projection: one big MXU matmul over all S*Bp rows.
    gx = matmul_bias(x_flat, w_ih_t, b)                  # (S*Bp, 4H) f32

    # Time-chunk size from a VMEM budget (gx + y chunks, double-buffered, f32).
    bytes_per_step = 2 * Bp * 4 * (4 * H + H)
    t_chunk = max(1, min(S, _CHUNK_BUDGET // bytes_per_step))
    n_chunk = pl.cdiv(S, t_chunk)
    ragged = (n_chunk * t_chunk != S)

    kernel = functools.partial(_lstm_recurrence_kernel,
                               s_total=S, ragged=ragged)

    y_flat, h_n, c_n = pl.pallas_call(
        kernel,
        out_shape=(
            jax.ShapeDtypeStruct((S * Bp, H), jnp.float32),
            jax.ShapeDtypeStruct((Bp, H), jnp.float32),
            jax.ShapeDtypeStruct((Bp, H), jnp.float32),
        ),
        grid_spec=pltpu.PrefetchScalarGridSpec(
            num_scalar_prefetch=0,
            grid=(n_chunk,),
            in_specs=[
                pl.BlockSpec((t_chunk * Bp, 4 * H), lambda i: (i, 0)),
                pl.BlockSpec((H, 4 * H), lambda i: (0, 0)),
                pl.BlockSpec((Bp, H), lambda i: (0, 0)),
                pl.BlockSpec((Bp, H), lambda i: (0, 0)),
            ],
            out_specs=(
                pl.BlockSpec((t_chunk * Bp, H), lambda i: (i, 0)),
                pl.BlockSpec((Bp, H), lambda i: (0, 0)),
                pl.BlockSpec((Bp, H), lambda i: (0, 0)),
            ),
        ),
        compiler_params=pltpu.CompilerParams(
            dimension_semantics=("arbitrary",),
            vmem_limit_bytes=_VMEM_LIMIT),
    )(gx, w_hh_t, h0, c0)
    return y_flat, h_n, c_n


def _reorder_gates(w, H):
    """Reorder last-dim gate blocks from PyTorch (i,f,g,o) to (i,f,o,g)."""
    i, f, g, o = (w[..., 0 * H:1 * H], w[..., 1 * H:2 * H],
                  w[..., 2 * H:3 * H], w[..., 3 * H:4 * H])
    return jnp.concatenate([i, f, o, g], axis=-1)


class LstmBlock:
    """JAX/Pallas port of the PyTorch LstmBlock (forward only)."""

    def __init__(self, n_in, n_out, n_hidden, n_layer, key):
        self.n_in, self.n_out = n_in, n_out
        self.n_hidden, self.n_layer = n_hidden, n_layer
        H = n_hidden
        k = 1.0 / jnp.sqrt(jnp.float32(n_hidden))
        self.params = []
        for layer in range(n_layer):
            in_sz = n_in if layer == 0 else n_hidden
            key, k1, k2, k3, k4 = jax.random.split(key, 5)
            # PyTorch stores (4H, in); keep transposed (in, 4H), gates [i|f|o|g].
            w_ih_t = jax.random.uniform(k1, (in_sz, 4 * H), jnp.float32, -k, k)
            w_hh_t = jax.random.uniform(k2, (H, 4 * H), jnp.float32, -k, k)
            b_ih = jax.random.uniform(k3, (4 * H,), jnp.float32, -k, k)
            b_hh = jax.random.uniform(k4, (4 * H,), jnp.float32, -k, k)
            self.params.append((
                _reorder_gates(w_ih_t, H).astype(jnp.bfloat16),
                _reorder_gates(w_hh_t, H).astype(jnp.bfloat16),
                _reorder_gates(b_ih + b_hh, H).reshape(1, 4 * H),   # f32
            ))
        if n_out is not None:
            key, k1, k2 = jax.random.split(key, 3)
            n_out_pad = _round_up(n_out, _LANE)
            fc_w = jax.random.uniform(k1, (H, n_out), jnp.float32, -k, k)
            fc_b = jax.random.uniform(k2, (n_out,), jnp.float32, -k, k)
            # Lane-pad the FC output dim so stores are unmasked; slice on host.
            self.fc_w_t = jnp.pad(
                fc_w, ((0, 0), (0, n_out_pad - n_out))).astype(jnp.bfloat16)
            self.fc_b = jnp.pad(fc_b, (0, n_out_pad - n_out)).reshape(1, -1)
        else:
            self.fc_w_t, self.fc_b = None, None

    def __call__(self, x, h):
        h0, c0 = h                                   # each (n_layer, B, H)
        S, B, _ = x.shape
        # Pad batch to a full sublane so per-step loads/stores and the MXU row
        # dimension are unmasked; padded rows are independent, sliced off.
        Bp = _round_up(max(B, _SUBLANE), _SUBLANE)
        x_p = jnp.pad(x, ((0, 0), (0, Bp - B), (0, 0)))
        h0_p = jnp.pad(h0, ((0, 0), (0, Bp - B), (0, 0)))
        c0_p = jnp.pad(c0, ((0, 0), (0, Bp - B), (0, 0)))

        y = x_p.reshape(S * Bp, -1)                  # time-major flatten
        h_fin, c_fin = [], []
        for layer in range(self.n_layer):
            w_ih_t, w_hh_t, b = self.params[layer]
            y, h_l, c_l = lstm_layer(y.astype(jnp.bfloat16), S,
                                     w_ih_t, w_hh_t, b,
                                     h0_p[layer], c0_p[layer])
            h_fin.append(h_l[:B])
            c_fin.append(c_l[:B])
        if self.fc_w_t is not None:
            y = matmul_bias(y.astype(jnp.bfloat16), self.fc_w_t, self.fc_b)
            y = y[:, :self.n_out]                    # drop lane padding
            n_last = self.n_out
        else:
            n_last = self.n_hidden
        y = y.reshape(S, Bp, n_last)[:, :B]
        return y, (jnp.stack(h_fin, axis=0), jnp.stack(c_fin, axis=0))


# ---------------------------------------------------------------------------
# Pure-JAX reference (same bf16-operand / f32-accumulate numerics as kernels)
# ---------------------------------------------------------------------------
def _reference(model, x, h):
    h0, c0 = h
    H = model.n_hidden
    y = x
    hs, cs = [], []
    for layer in range(model.n_layer):
        w_ih_t, w_hh_t, b = model.params[layer]
        hh, cc = h0[layer], c0[layer]
        outs = []
        for t in range(y.shape[0]):
            g = (jnp.dot(y[t].astype(jnp.bfloat16), w_ih_t,
                         preferred_element_type=jnp.float32)
                 + jnp.dot(hh.astype(jnp.bfloat16), w_hh_t,
                           preferred_element_type=jnp.float32)
                 + b)
            i = jax.nn.sigmoid(g[:, 0 * H:1 * H])
            f = jax.nn.sigmoid(g[:, 1 * H:2 * H])
            o = jax.nn.sigmoid(g[:, 2 * H:3 * H])
            gg = jnp.tanh(g[:, 3 * H:4 * H])
            cc = f * cc + i * gg
            hh = o * jnp.tanh(cc)
            outs.append(hh)
        y = jnp.stack(outs, axis=0)
        hs.append(hh)
        cs.append(cc)
    if model.fc_w_t is not None:
        y = (jnp.dot(y.astype(jnp.bfloat16), model.fc_w_t,
                     preferred_element_type=jnp.float32)
             + model.fc_b)[..., :model.n_out]
    return y, (jnp.stack(hs), jnp.stack(cs))


if __name__ == "__main__":
    n_in, n_out, n_hidden, n_layer = 16, 8, 32, 2
    seq, batch = 8, 2

    key = jax.random.PRNGKey(0)
    key, kx, kh, kc, kp = jax.random.split(key, 5)
    x = jax.random.normal(kx, (seq, batch, n_in), jnp.float32)
    h0 = jax.random.normal(kh, (n_layer, batch, n_hidden), jnp.float32)
    c0 = jax.random.normal(kc, (n_layer, batch, n_hidden), jnp.float32)

    model = LstmBlock(n_in, n_out, n_hidden, n_layer, kp)

    y, (h_n, c_n) = model(x, (h0, c0))
    jax.block_until_ready((y, h_n, c_n))

    y_ref, (h_ref, c_ref) = _reference(model, x, (h0, c0))
    assert y.shape == (seq, batch, n_out)
    assert h_n.shape == (n_layer, batch, n_hidden)
    assert c_n.shape == (n_layer, batch, n_hidden)
    assert jnp.allclose(y, y_ref, atol=2e-3, rtol=2e-3)
    assert jnp.allclose(h_n, h_ref, atol=2e-3, rtol=2e-3)
    assert jnp.allclose(c_n, c_ref, atol=2e-3, rtol=2e-3)

    print("KERNEL_OK")
</pallas_src>

<mosaic_0001>
module attributes {stable_mosaic.version = 11 : i64} {
  func.func @_matmul_bias_kernel(%arg0: i32, %arg1: memref<64x16xbf16, #tpu.memory_space<vmem>>, %arg2: memref<16x128xbf16, #tpu.memory_space<vmem>>, %arg3: memref<1x128xf32, #tpu.memory_space<vmem>>, %arg4: memref<64x128xf32, #tpu.memory_space<vmem>>) attributes {dimension_semantics = [#tpu.dimension_semantics<parallel>], iteration_bounds = array<i64: 1>, scalar_prefetch = 0 : i64, scratch_operands = 0 : i64, tpu.core_type = #tpu.core_type<tc>, window_params = [{transform_indices = @transform_0, window_bounds = array<i64: 64, 16>}, {pipeline_mode = #tpu.pipeline_mode<synchronous>, transform_indices = @transform_1, window_bounds = array<i64: 16, 128>}, {pipeline_mode = #tpu.pipeline_mode<synchronous>, transform_indices = @transform_2, window_bounds = array<i64: 1, 128>}, {transform_indices = @transform_3, window_bounds = array<i64: 64, 128>}]} {
    %c0 = arith.constant 0 : index
    %c0_0 = arith.constant 0 : index
    %0 = vector.load %arg1[%c0, %c0_0] : memref<64x16xbf16, #tpu.memory_space<vmem>>, vector<64x16xbf16>
    %c0_1 = arith.constant 0 : index
    %c0_2 = arith.constant 0 : index
    %1 = vector.load %arg2[%c0_1, %c0_2] : memref<16x128xbf16, #tpu.memory_space<vmem>>, vector<16x128xbf16>
    %cst = arith.constant dense<0.000000e+00> : vector<64x128xf32>
    %2 = tpu.matmul %0, %1, %cst {dimension_numbers = #tpu.dot_dimension_numbers<[1], [0], [0], [1], [0, 0, 1, 1], [], []>} : vector<64x16xbf16>, vector<16x128xbf16>, vector<64x128xf32> -> vector<64x128xf32>
    %c0_3 = arith.constant 0 : index
    %c0_4 = arith.constant 0 : index
    %3 = vector.load %arg3[%c0_3, %c0_4] : memref<1x128xf32, #tpu.memory_space<vmem>>, vector<1x128xf32>
    %4 = vector.broadcast %3 : vector<1x128xf32> to vector<64x128xf32>
    %5 = arith.addf %2, %4 : vector<64x128xf32>
    %c0_5 = arith.constant 0 : index
    %c0_6 = arith.constant 0 : index
    %6 = vector.load %arg4[%c0_5, %c0_6] : memref<64x128xf32, #tpu.memory_space<vmem>>, vector<64x128xf32>
    tpu.vector_store %arg4[%c0_5, %c0_6], %5 {strides = array<i32>} : memref<64x128xf32, #tpu.memory_space<vmem>>, vector<64x128xf32>,
    return
  }
  func.func @transform_0(%arg0: i32) -> (i32, i32) {
    %c0_i32 = arith.constant 0 : i32
    %c0_i32_0 = arith.constant 0 : i32
    return %arg0, %c0_i32 : i32, i32
  }
  func.func @transform_1(%arg0: i32) -> (i32, i32) {
    %c0_i32 = arith.constant 0 : i32
    %c0_i32_0 = arith.constant 0 : i32
    %c0_i32_1 = arith.constant 0 : i32
    return %c0_i32, %c0_i32_0 : i32, i32
  }
  func.func @transform_2(%arg0: i32) -> (i32, i32) {
    %c0_i32 = arith.constant 0 : i32
    %c0_i32_0 = arith.constant 0 : i32
    %c0_i32_1 = arith.constant 0 : i32
    return %c0_i32, %c0_i32_0 : i32, i32
  }
  func.func @transform_3(%arg0: i32) -> (i32, i32) {
    %c0_i32 = arith.constant 0 : i32
    %c0_i32_0 = arith.constant 0 : i32
    return %arg0, %c0_i32 : i32, i32
  }
}

</mosaic_0001>

<llo_original>
// kernel: tpu_custom_call.1
$region0: #{tpu_custom_call.1}
  #allocation0 [shape = 'u32[]', space=smem, size = 0x4, offset = 0x4, fixed_abs, tag = 'smem constant byte address 0x4 - core index']
  #allocation1 [shape = 'u32[144,128]{1,0:T(1,128)}', space=vmem, size = 0x12000, scoped, tag = 'internal scratch']
  %s0 = inlined_call_operand.vmem [shape: bf16[64,16], index: 0, kind: input, shape index: {}]
  %s1 = inlined_call_operand.vmem [shape: bf16[16,128], index: 1, kind: input, shape index: {}]
  %s2 = inlined_call_operand.vmem [shape: f32[1,128], index: 2, kind: input, shape index: {}]
  %s3 = inlined_call_operand.hbm [shape: f32[64,128], index: 3, kind: output, shape index: {}]
  %s4 = sld [smem:[#allocation0]]
  $region22: #{tpu_custom_call.1} parent=0
    _
  %s6 = ssub.s32 1, %s4
  %s7 = scalar_select 0, %s6, %s4
  $region1: #{tpu_custom_call.1} parent=0
    #allocation2 [shape = 'u8[32768]{0}', space=vmem, size = 0x8000, scoped, tag = 'output window, operand 0, single buffered']
    #allocation3 [shape = 's32[1]{0}', space=sflag, size = 0x4, scoped, tag = 'scoped memory for tpu_custom_call.1']
    %8 = vsyncpa [#allocation3], 0
    // Predicated region
    $region2: #{tpu_custom_call.1} parent=1 // pred_check
      _
    $region3: #{tpu_custom_call.1} parent=1 // pred_check_branch
      %10 = sbr.rel (0) target = $region5
    $region4: #{tpu_custom_call.1} parent=1 // pred_region
      _
    $region5: #{tpu_custom_call.1} parent=1 // pred_fallthru
      _
    // Predicated region
    $region6: #{tpu_custom_call.1} parent=1 // pred_check
      _
    $region7: #{tpu_custom_call.1} parent=1 // pred_check_branch
      %12 = sbr.rel (0) target = $region9
    $region8: #{tpu_custom_call.1} parent=1 // pred_region
      _
    $region9: #{tpu_custom_call.1} parent=1 // pred_fallthru
      _
    // Predicated region
    $region10: #{tpu_custom_call.1} parent=1 // pred_check
      _
    $region11: #{tpu_custom_call.1} parent=1 // pred_check_branch
      %14 = sbr.rel (0) target = $region13
    $region12: #{tpu_custom_call.1} parent=1 // pred_region
      _
    $region13: #{tpu_custom_call.1} parent=1 // pred_fallthru
      _
    %v16 = vld [vmem:[%s0] sm:$0xf]
    %v17 = vld [vmem:[%s0 + $0x4] sm:$0xf]
    %v18 = vld [vmem:[%s0 + $0x8] sm:$0xf]
    %v19 = vld [vmem:[%s0 + $0xc] sm:$0xf]
    %v20 = vld [vmem:[%s0 + $0x10] sm:$0xf]
    %v21 = vld [vmem:[%s0 + $0x14] sm:$0xf]
    %v22 = vld [vmem:[%s0 + $0x18] sm:$0xf]
    %v23 = vld [vmem:[%s0 + $0x1c] sm:$0xf]
    %v24 = vld [vmem:[%s1] sm:$0xf]
    %v25 = vld [vmem:[%s1 + $0x4] sm:$0xf]
    %v26 = vld [vmem:[%s2] sm:$0x1]
    %v28 = vlaneseq
    %v29 = vshrl.u32 %v28, 7
    %v30 = vsub.s32 0, %v29
    %v31 = vrot.slane %v26, %v30
    %v41 = vunpack.c.l.b16 %v16
    %v42 = vunpack.c.l.b16 %v17
    %v43 = vunpack.c.l.b16 %v18
    %v44 = vunpack.c.l.b16 %v19
    %v45 = vunpack.c.l.b16 %v20
    %v46 = vunpack.c.l.b16 %v21
    %v47 = vunpack.c.l.b16 %v22
    %v48 = vunpack.c.l.b16 %v23
    %v49 = vpack.c.b16 %v42, %v41
    %v50 = vpack.c.b16 %v44, %v43
    %v51 = vpack.c.b16 %v46, %v45
    %v52 = vpack.c.b16 %v48, %v47
    %v55 = vunpack.c.l.b16 %v24
    %v56 = vunpack.c.l.b16 %v25
    %v57 = vpack.c.b16 %v56, %v55
    %vm59 = vcmask 130048
    %v61 = vsel %vm59, %v49, 0
    %v64 = vsel %vm59, %v50, 0
    %v67 = vsel %vm59, %v51, 0
    %v70 = vsel %vm59, %v52, 0
    %72 = vmatprep.subr.bf16.mxu0 0
    %73 = vmatpush1.bf16.msra.mxu0 0
    %74 = vmatprep.subr.bf16.mxu0 0
    %75 = vmatpush1.bf16.msra.mxu0 0
    %76 = vmatprep.subr.bf16.mxu0 0
    %77 = vmatpush1.bf16.msra.mxu0 0
    %78 = vmatprep.subr.bf16.mxu0 0
    %79 = vmatpush1.bf16.msra.mxu0 0
    %80 = vmatprep.subr.bf16.mxu0 0
    %81 = vmatpush1.bf16.msra.mxu0 0
    %82 = vmatprep.subr.bf16.mxu0 0
    %83 = vmatpush1.bf16.msra.mxu0 0
    %84 = vmatprep.subr.bf16.mxu0 0
    %85 = vmatpush1.bf16.msra.mxu0 0
    %86 = vmatprep.subr.bf16.mxu0 0
    %87 = vmatpush1.bf16.msra.mxu0 %v57
    %88 = vmatprep.subr.bf16.mxu0 0
    %89 = vmatpush2.bf16.msra.mxu0 0
    %90 = vmatprep.subr.bf16.mxu0 0
    %91 = vmatpush2.bf16.msra.mxu0 0
    %92 = vmatprep.subr.bf16.mxu0 0
    %93 = vmatpush2.bf16.msra.mxu0 0
    %94 = vmatprep.subr.bf16.mxu0 0
    %95 = vmatpush2.bf16.msra.mxu0 0
    %96 = vmatprep.subr.bf16.mxu0 0
    %97 = vmatpush2.bf16.msra.mxu0 0
    %98 = vmatprep.subr.bf16.mxu0 0
    %99 = vmatpush2.bf16.msra.mxu0 0
    %100 = vmatprep.subr.bf16.mxu0 0
    %101 = vmatpush2.bf16.msra.mxu0 0
    %102 = vmatprep.subr.bf16.mxu0 0
    %103 = vmatpush2.bf16.msra.mxu0 0
    %104 = vmatprep.mubr.bf16.mxu0 0
    %105 = vmatmul.mubr.bf16.gmra.mxu0 %v61
    %v106 = vpop.f32.mrf.mxu0
    %v107 = vadd.f32 %v31, %v106
    %v108 = vpop.f32.mrf.mxu0
    %v109 = vpop.f32.mrf.mxu0
    %v110 = vadd.f32 %v31, %v109
    %v111 = vpop.f32.mrf.mxu0
    %112 = vmatprep.mubr.bf16.mxu0 0
    %113 = vmatmul.mubr.bf16.gmra.mxu0 %v64
    %v114 = vpop.f32.mrf.mxu0
    %v115 = vadd.f32 %v31, %v114
    %v116 = vpop.f32.mrf.mxu0
    %v117 = vpop.f32.mrf.mxu0
    %v118 = vadd.f32 %v31, %v117
    %v119 = vpop.f32.mrf.mxu0
    %120 = vmatprep.mubr.bf16.mxu0 0
    %121 = vmatmul.mubr.bf16.gmra.mxu0 %v67
    %v122 = vpop.f32.mrf.mxu0
    %v123 = vadd.f32 %v31, %v122
    %v124 = vpop.f32.mrf.mxu0
    %v125 = vpop.f32.mrf.mxu0
    %v126 = vadd.f32 %v31, %v125
    %v127 = vpop.f32.mrf.mxu0
    %128 = vmatprep.mubr.bf16.mxu0 0
    %129 = vmatmul.mubr.bf16.gmra.mxu0 %v70
    %v130 = vpop.f32.mrf.mxu0
    %v131 = vadd.f32 %v31, %v130
    %v132 = vpop.f32.mrf.mxu0
    %v133 = vpop.f32.mrf.mxu0
    %v134 = vadd.f32 %v31, %v133
    %v135 = vpop.f32.mrf.mxu0
    %136 = vdwg.mxu0
    %137 = vst [vmem:[#allocation2] sm:$0xff] %v107
    %138 = vst [vmem:[#allocation2 + $0x8] sm:$0xff] %v110
    %139 = vst [vmem:[#allocation2 + $0x10] sm:$0xff] %v115
    %140 = vst [vmem:[#allocation2 + $0x18] sm:$0xff] %v118
    %141 = vst [vmem:[#allocation2 + $0x20] sm:$0xff] %v123
    %142 = vst [vmem:[#allocation2 + $0x28] sm:$0xff] %v126
    %143 = vst [vmem:[#allocation2 + $0x30] sm:$0xff] %v131
    %144 = vst [vmem:[#allocation2 + $0x38] sm:$0xff] %v134
    // Predicated region
    $region14: #{tpu_custom_call.1} parent=1 // pred_check
      _
    $region15: #{tpu_custom_call.1} parent=1 // pred_check_branch
      %146 = sbr.rel (0) target = $region17
    $region16: #{tpu_custom_call.1} parent=1 // pred_region
      %s148 = ssub.s32 1024, 1024
      %149 = vsyncadd [#allocation3], %s148
      %s150 = sshll.u32 [#allocation2], 4
      %s151 = int_to_ptr.vmem [resolvable:$true] %s150
      %156 = dma.vmem_to_hbm [thread:$0]  %s151, 1024, %s3, [#allocation3], 128, 128, 8
    $region17: #{tpu_custom_call.1} parent=1 // pred_fallthru
      _
    // Predicated region
    $region18: #{tpu_custom_call.1} parent=1 // pred_check
      _
    $region19: #{tpu_custom_call.1} parent=1 // pred_check_branch
      %158 = sbr.rel (0) target = $region21
    $region20: #{tpu_custom_call.1} parent=1 // pred_region
      %159 = dma.done [#allocation3], 1024
    $region21: #{tpu_custom_call.1} parent=1 // pred_fallthru
      _
    %160 = vsyncpa [#allocation3], 1

</llo_original>
